<compile_context>
chip_gen: v7x
topology: tpu7x:2x2x1
jax: 0.10.0
libtpu: 0.0.40
codegen_flags: <defaults>
</compile_context>

<pallas_src>
import jax
import jax.numpy as jnp
from jax.experimental import pallas as pl
from jax.experimental.pallas import tpu as pltpu

LN_EPS = 1e-5  # torch.nn.LayerNorm default


def vnet_kernel(x_ref,
                w1_ref, b1_ref,          # layer 1 Linear
                w2_ref, b2_ref,          # layer 2 Linear (LN1 affine folded in)
                m2_ref, b3_ref,          # [ones | centered g2*w3], folded bias
                o_ref):
    f32 = jnp.float32
    mxu_dt = w1_ref.dtype
    H1 = w1_ref.shape[1]
    H2 = w2_ref.shape[1]

    x = x_ref[...].astype(mxu_dt)

    # ----- layer 1: Linear -> ReLU (bias added in f32 after accumulation) -----
    h = jnp.dot(x, w1_ref[...], preferred_element_type=f32) + b1_ref[...]
    h = jnp.maximum(h, 0.0)

    # LayerNorm-1 statistics on the MXU (ones-matmuls instead of XLU reduce).
    ones1 = jnp.ones((H1, 1), mxu_dt)
    s1 = jnp.dot(h.astype(mxu_dt), ones1, preferred_element_type=f32)       # sum
    q1 = jnp.dot((h * h).astype(mxu_dt), ones1, preferred_element_type=f32)  # sumsq
    mean1 = s1 * (1.0 / H1)
    var1 = jnp.maximum(q1 * (1.0 / H1) - mean1 * mean1, 0.0)
    y1 = ((h - mean1) * jax.lax.rsqrt(var1 + LN_EPS)).astype(mxu_dt)  # affine folded

    # ----- layer 2: Linear -> ReLU (LN1 gamma/beta already folded into w2/b2) -----
    h2 = jnp.dot(y1, w2_ref[...], preferred_element_type=f32) + b2_ref[...]
    h2 = jnp.maximum(h2, 0.0)

    # LayerNorm-2 stats + final Linear fused into one (H2, 2) matmul:
    #   st[:, 0] = sum(h2),  st[:, 1] = h2 @ (g2*w3 - mean(g2*w3))
    ones2 = jnp.ones((H2, 1), mxu_dt)
    st = jnp.dot(h2.astype(mxu_dt), m2_ref[...], preferred_element_type=f32)
    q2 = jnp.dot((h2 * h2).astype(mxu_dt), ones2, preferred_element_type=f32)
    mean2 = st[:, 0:1] * (1.0 / H2)
    var2 = jnp.maximum(q2 * (1.0 / H2) - mean2 * mean2, 0.0)
    v = st[:, 1:2] * jax.lax.rsqrt(var2 + LN_EPS) + b3_ref[...]
    o_ref[...] = v.astype(o_ref.dtype)


def vnet_forward(x, params, *, block_m=4096, mxu_dtype=jnp.bfloat16):
    """x: (B, state_size) float32 -> (B, 1) float32."""
    (w1, b1, g1, be1, w2, b2, g2, be2, w3, b3) = params
    B, S = x.shape
    H1 = w1.shape[1]
    H2 = w2.shape[1]
    f32 = jnp.float32

    # ---- host-side precompute: fold LN affines into the following Linear ----
    b1v = jnp.reshape(b1, (1, H1)).astype(f32)
    g1v = jnp.reshape(g1, (H1,)).astype(f32)
    be1v = jnp.reshape(be1, (1, H1)).astype(f32)
    w2f = g1v[:, None] * w2.astype(f32)                               # (H1, H2)
    b2f = jnp.reshape(b2, (1, H2)).astype(f32) + be1v @ w2.astype(f32)
    g2v = jnp.reshape(g2, (H2,)).astype(f32)
    be2v = jnp.reshape(be2, (1, H2)).astype(f32)
    w3f = g2v[:, None] * w3.astype(f32)                               # (H2, 1)
    b3f = jnp.reshape(b3, (1, 1)).astype(f32) + be2v @ w3.astype(f32)
    w3c = w3f - jnp.mean(w3f)            # LN2 mean-subtraction folded into w3
    m2 = jnp.concatenate([jnp.ones((H2, 1), f32), w3c], axis=1)      # (H2, 2)

    # MXU operands in mxu_dtype (bf16 default); biases stay f32.
    w1m = w1.astype(mxu_dtype)
    w2m = w2f.astype(mxu_dtype)
    m2m = m2.astype(mxu_dtype)

    # ---- batch tiling: big tiles to amortize per-step overhead, >=2 tiles
    #      when B allows (v7x megacore), multiple of 8 sublanes ----
    bm = max(8, int(block_m))
    if B > 8:
        bm = min(bm, (B + 1) // 2)
    bm = min(bm, max(B, 8))
    bm = ((bm + 7) // 8) * 8
    n_tiles = pl.cdiv(B, bm)

    def resident(a):
        # Full-array block, constant index map -> stays VMEM-resident.
        return pl.BlockSpec(a.shape, lambda *_: (0,) * a.ndim)

    flops = 2 * B * (S * H1 + H1 * H2 + 2 * H1 + 3 * H2) + 10 * B * (H1 + H2)
    weights = (w1m, b1v, w2m, b2f, m2m, b3f)
    bytes_accessed = (int(x.size) * x.dtype.itemsize + B * 4
                      + sum(int(a.size) * a.dtype.itemsize for a in weights))
    cost = pl.CostEstimate(flops=int(flops), transcendentals=int(2 * B),
                           bytes_accessed=int(bytes_accessed))

    return pl.pallas_call(
        vnet_kernel,
        out_shape=jax.ShapeDtypeStruct((B, 1), f32),
        grid=(n_tiles,),
        in_specs=[pl.BlockSpec((bm, S), lambda i: (i, 0)),
                  resident(w1m), resident(b1v),
                  resident(w2m), resident(b2f),
                  resident(m2m), resident(b3f)],
        out_specs=pl.BlockSpec((bm, 1), lambda i: (i, 0)),
        compiler_params=pltpu.CompilerParams(
            dimension_semantics=("parallel",),
            vmem_limit_bytes=32 * 1024 * 1024),
        cost_estimate=cost,
    )(x, w1m, b1v, w2m, b2f, m2m, b3f)


def init_vnet_params(key, state_size, hidden_sizes=(64, 64), gain_final=0.003):
    """Deterministic synthetic init (shapes match the PyTorch module).
    Gamma/beta/biases are random (not the torch defaults) so that the
    wrapper-side affine folding is actually exercised by the tests."""
    ks = jax.random.split(key, 9)
    h1, h2 = hidden_sizes
    w1 = jax.random.normal(ks[0], (state_size, h1), jnp.float32) * (2.0 / state_size) ** 0.5
    b1 = 0.05 * jax.random.normal(ks[1], (1, h1), jnp.float32)
    w2 = jax.random.normal(ks[2], (h1, h2), jnp.float32) * (2.0 / h1) ** 0.5
    b2 = 0.05 * jax.random.normal(ks[3], (1, h2), jnp.float32)
    g1 = 1.0 + 0.1 * jax.random.normal(ks[4], (1, h1), jnp.float32)
    be1 = 0.1 * jax.random.normal(ks[5], (1, h1), jnp.float32)
    g2 = 1.0 + 0.1 * jax.random.normal(ks[6], (1, h2), jnp.float32)
    be2 = 0.1 * jax.random.normal(ks[7], (1, h2), jnp.float32)
    w3 = jax.random.normal(ks[8], (h2, 1), jnp.float32) * gain_final
    b3 = jnp.full((1, 1), 0.01, jnp.float32)
    return (w1, b1, g1, be1, w2, b2, g2, be2, w3, b3)


def _layernorm_ref(h, g, b):
    mean = jnp.mean(h, axis=-1, keepdims=True)
    var = jnp.mean((h - mean) ** 2, axis=-1, keepdims=True)
    return ((h - mean) * jax.lax.rsqrt(var + LN_EPS)
            * jnp.reshape(g, (1, -1)) + jnp.reshape(b, (1, -1)))


def vnet_reference(x, params):
    """Pure-JAX f32 reference matching the PyTorch module exactly."""
    (w1, b1, g1, be1, w2, b2, g2, be2, w3, b3) = params
    h = jnp.maximum(x @ w1 + jnp.reshape(b1, (1, -1)), 0.0)
    h = _layernorm_ref(h, g1, be1)
    h = jnp.maximum(h @ w2 + jnp.reshape(b2, (1, -1)), 0.0)
    h = _layernorm_ref(h, g2, be2)
    return h @ w3 + jnp.reshape(b3, (1, 1))


if __name__ == "__main__":
    key = jax.random.PRNGKey(0)
    k_param, k1, k2, k3 = jax.random.split(key, 4)

    state_size = 32
    params = init_vnet_params(k_param, state_size, (64, 64))

    # --- small smoke test (single tile, default bf16 MXU path) ---
    x_small = jax.random.normal(k1, (8, state_size), jnp.float32)
    out_small = jax.block_until_ready(vnet_forward(x_small, params))
    ref_small = vnet_reference(x_small, params)
    assert out_small.shape == (8, 1), out_small.shape
    assert bool(jnp.all(jnp.isfinite(out_small)))
    assert jnp.allclose(out_small, ref_small, atol=5e-3, rtol=5e-2)

    # --- f32-MXU path: tight check of the math (affine folding, fused
    #     LN-stats/final-layer matmuls, boundary tiles) ---
    x_big = jax.random.normal(k2, (300, state_size), jnp.float32)
    ref_big = vnet_reference(x_big, params)
    out_f32 = jax.block_until_ready(
        vnet_forward(x_big, params, block_m=128, mxu_dtype=jnp.float32))
    assert out_f32.shape == (300, 1), out_f32.shape
    assert jnp.allclose(out_f32, ref_big, atol=1e-4, rtol=1e-3)

    # --- default bf16-MXU path, multi-tile grid with a partial boundary tile ---
    out_big = jax.block_until_ready(vnet_forward(x_big, params, block_m=128))
    assert out_big.shape == (300, 1), out_big.shape
    assert jnp.allclose(out_big, ref_big, atol=5e-3, rtol=5e-2)

    # --- ragged batch (not a multiple of 8): masked boundary stores ---
    x_rag = jax.random.normal(k3, (37, state_size), jnp.float32)
    out_rag = jax.block_until_ready(vnet_forward(x_rag, params))
    ref_rag = vnet_reference(x_rag, params)
    assert out_rag.shape == (37, 1), out_rag.shape
    assert jnp.allclose(out_rag, ref_rag, atol=5e-3, rtol=5e-2)

    print("KERNEL_OK")
</pallas_src>

<mosaic_0001>
module attributes {stable_mosaic.version = 11 : i64} {
  func.func @vnet_kernel(%arg0: i32, %arg1: memref<8x32xf32, #tpu.memory_space<vmem>>, %arg2: memref<32x64xbf16, #tpu.memory_space<vmem>>, %arg3: memref<1x64xf32, #tpu.memory_space<vmem>>, %arg4: memref<64x64xbf16, #tpu.memory_space<vmem>>, %arg5: memref<1x64xf32, #tpu.memory_space<vmem>>, %arg6: memref<64x2xbf16, #tpu.memory_space<vmem>>, %arg7: memref<1x1xf32, #tpu.memory_space<vmem>>, %arg8: memref<8x1xf32, #tpu.memory_space<vmem>>) attributes {dimension_semantics = [#tpu.dimension_semantics<parallel>], iteration_bounds = array<i64: 1>, scalar_prefetch = 0 : i64, scratch_operands = 0 : i64, tpu.core_type = #tpu.core_type<tc>, window_params = [{transform_indices = @transform_0, window_bounds = array<i64: 8, 32>}, {pipeline_mode = #tpu.pipeline_mode<synchronous>, transform_indices = @transform_1, window_bounds = array<i64: 32, 64>}, {pipeline_mode = #tpu.pipeline_mode<synchronous>, transform_indices = @transform_2, window_bounds = array<i64: 1, 64>}, {pipeline_mode = #tpu.pipeline_mode<synchronous>, transform_indices = @transform_3, window_bounds = array<i64: 64, 64>}, {pipeline_mode = #tpu.pipeline_mode<synchronous>, transform_indices = @transform_4, window_bounds = array<i64: 1, 64>}, {pipeline_mode = #tpu.pipeline_mode<synchronous>, transform_indices = @transform_5, window_bounds = array<i64: 64, 2>}, {pipeline_mode = #tpu.pipeline_mode<synchronous>, transform_indices = @transform_6, window_bounds = array<i64: 1, 1>}, {transform_indices = @transform_7, window_bounds = array<i64: 8, 1>}]} {
    %c0 = arith.constant 0 : index
    %c0_0 = arith.constant 0 : index
    %0 = vector.load %arg1[%c0, %c0_0] : memref<8x32xf32, #tpu.memory_space<vmem>>, vector<8x32xf32>
    %1 = arith.truncf %0 : vector<8x32xf32> to vector<8x32xbf16>
    %c0_1 = arith.constant 0 : index
    %c0_2 = arith.constant 0 : index
    %2 = vector.load %arg2[%c0_1, %c0_2] : memref<32x64xbf16, #tpu.memory_space<vmem>>, vector<32x64xbf16>
    %cst = arith.constant dense<0.000000e+00> : vector<8x64xf32>
    %3 = tpu.matmul %1, %2, %cst {dimension_numbers = #tpu.dot_dimension_numbers<[1], [0], [0], [1], [0, 0, 1, 1], [], []>} : vector<8x32xbf16>, vector<32x64xbf16>, vector<8x64xf32> -> vector<8x64xf32>
    %c0_3 = arith.constant 0 : index
    %c0_4 = arith.constant 0 : index
    %4 = vector.load %arg3[%c0_3, %c0_4] : memref<1x64xf32, #tpu.memory_space<vmem>>, vector<1x64xf32>
    %5 = vector.broadcast %4 : vector<1x64xf32> to vector<8x64xf32>
    %6 = arith.addf %3, %5 : vector<8x64xf32>
    %cst_5 = arith.constant 0.000000e+00 : f32
    %7 = vector.broadcast %cst_5 : f32 to vector<8x64xf32>
    %8 = arith.maximumf %6, %7 : vector<8x64xf32>
    %cst_6 = arith.constant 1.000000e+00 : bf16
    %9 = vector.broadcast %cst_6 : bf16 to vector<64x1xbf16>
    %10 = arith.truncf %8 : vector<8x64xf32> to vector<8x64xbf16>
    %cst_7 = arith.constant dense<0.000000e+00> : vector<8x1xf32>
    %11 = tpu.matmul %10, %9, %cst_7 {dimension_numbers = #tpu.dot_dimension_numbers<[1], [0], [0], [1], [0, 0, 1, 1], [], []>} : vector<8x64xbf16>, vector<64x1xbf16>, vector<8x1xf32> -> vector<8x1xf32>
    %12 = arith.mulf %8, %8 : vector<8x64xf32>
    %13 = arith.truncf %12 : vector<8x64xf32> to vector<8x64xbf16>
    %cst_8 = arith.constant dense<0.000000e+00> : vector<8x1xf32>
    %14 = tpu.matmul %13, %9, %cst_8 {dimension_numbers = #tpu.dot_dimension_numbers<[1], [0], [0], [1], [0, 0, 1, 1], [], []>} : vector<8x64xbf16>, vector<64x1xbf16>, vector<8x1xf32> -> vector<8x1xf32>
    %cst_9 = arith.constant 1.562500e-02 : f32
    %15 = vector.broadcast %cst_9 : f32 to vector<8x1xf32>
    %16 = arith.mulf %11, %15 : vector<8x1xf32>
    %cst_10 = arith.constant 1.562500e-02 : f32
    %17 = vector.broadcast %cst_10 : f32 to vector<8x1xf32>
    %18 = arith.mulf %14, %17 : vector<8x1xf32>
    %19 = arith.mulf %16, %16 : vector<8x1xf32>
    %20 = arith.subf %18, %19 : vector<8x1xf32>
    %cst_11 = arith.constant 0.000000e+00 : f32
    %21 = vector.broadcast %cst_11 : f32 to vector<8x1xf32>
    %22 = arith.maximumf %20, %21 : vector<8x1xf32>
    %23 = vector.broadcast %16 : vector<8x1xf32> to vector<8x64xf32>
    %24 = arith.subf %8, %23 : vector<8x64xf32>
    %cst_12 = arith.constant 9.99999974E-6 : f32
    %25 = vector.broadcast %cst_12 : f32 to vector<8x1xf32>
    %26 = arith.addf %22, %25 : vector<8x1xf32>
    %27 = math.rsqrt %26 : vector<8x1xf32>
    %28 = vector.broadcast %27 : vector<8x1xf32> to vector<8x64xf32>
    %29 = arith.mulf %24, %28 : vector<8x64xf32>
    %30 = arith.truncf %29 : vector<8x64xf32> to vector<8x64xbf16>
    %c0_13 = arith.constant 0 : index
    %c0_14 = arith.constant 0 : index
    %31 = vector.load %arg4[%c0_13, %c0_14] : memref<64x64xbf16, #tpu.memory_space<vmem>>, vector<64x64xbf16>
    %cst_15 = arith.constant dense<0.000000e+00> : vector<8x64xf32>
    %32 = tpu.matmul %30, %31, %cst_15 {dimension_numbers = #tpu.dot_dimension_numbers<[1], [0], [0], [1], [0, 0, 1, 1], [], []>} : vector<8x64xbf16>, vector<64x64xbf16>, vector<8x64xf32> -> vector<8x64xf32>
    %c0_16 = arith.constant 0 : index
    %c0_17 = arith.constant 0 : index
    %33 = vector.load %arg5[%c0_16, %c0_17] : memref<1x64xf32, #tpu.memory_space<vmem>>, vector<1x64xf32>
    %34 = vector.broadcast %33 : vector<1x64xf32> to vector<8x64xf32>
    %35 = arith.addf %32, %34 : vector<8x64xf32>
    %cst_18 = arith.constant 0.000000e+00 : f32
    %36 = vector.broadcast %cst_18 : f32 to vector<8x64xf32>
    %37 = arith.maximumf %35, %36 : vector<8x64xf32>
    %cst_19 = arith.constant 1.000000e+00 : bf16
    %38 = vector.broadcast %cst_19 : bf16 to vector<64x1xbf16>
    %39 = arith.truncf %37 : vector<8x64xf32> to vector<8x64xbf16>
    %c0_20 = arith.constant 0 : index
    %c0_21 = arith.constant 0 : index
    %40 = vector.load %arg6[%c0_20, %c0_21] : memref<64x2xbf16, #tpu.memory_space<vmem>>, vector<64x2xbf16>
    %cst_22 = arith.constant dense<0.000000e+00> : vector<8x2xf32>
    %41 = tpu.matmul %39, %40, %cst_22 {dimension_numbers = #tpu.dot_dimension_numbers<[1], [0], [0], [1], [0, 0, 1, 1], [], []>} : vector<8x64xbf16>, vector<64x2xbf16>, vector<8x2xf32> -> vector<8x2xf32>
    %42 = arith.mulf %37, %37 : vector<8x64xf32>
    %43 = arith.truncf %42 : vector<8x64xf32> to vector<8x64xbf16>
    %cst_23 = arith.constant dense<0.000000e+00> : vector<8x1xf32>
    %44 = tpu.matmul %43, %38, %cst_23 {dimension_numbers = #tpu.dot_dimension_numbers<[1], [0], [0], [1], [0, 0, 1, 1], [], []>} : vector<8x64xbf16>, vector<64x1xbf16>, vector<8x1xf32> -> vector<8x1xf32>
    %45 = vector.extract_strided_slice %41 {offsets = [0, 0], sizes = [8, 1], strides = [1, 1]} : vector<8x2xf32> to vector<8x1xf32>
    %cst_24 = arith.constant 1.562500e-02 : f32
    %46 = vector.broadcast %cst_24 : f32 to vector<8x1xf32>
    %47 = arith.mulf %45, %46 : vector<8x1xf32>
    %cst_25 = arith.constant 1.562500e-02 : f32
    %48 = vector.broadcast %cst_25 : f32 to vector<8x1xf32>
    %49 = arith.mulf %44, %48 : vector<8x1xf32>
    %50 = arith.mulf %47, %47 : vector<8x1xf32>
    %51 = arith.subf %49, %50 : vector<8x1xf32>
    %cst_26 = arith.constant 0.000000e+00 : f32
    %52 = vector.broadcast %cst_26 : f32 to vector<8x1xf32>
    %53 = arith.maximumf %51, %52 : vector<8x1xf32>
    %54 = vector.extract_strided_slice %41 {offsets = [0, 1], sizes = [8, 1], strides = [1, 1]} : vector<8x2xf32> to vector<8x1xf32>
    %cst_27 = arith.constant 9.99999974E-6 : f32
    %55 = vector.broadcast %cst_27 : f32 to vector<8x1xf32>
    %56 = arith.addf %53, %55 : vector<8x1xf32>
    %57 = math.rsqrt %56 : vector<8x1xf32>
    %58 = arith.mulf %54, %57 : vector<8x1xf32>
    %c0_28 = arith.constant 0 : index
    %c0_29 = arith.constant 0 : index
    %59 = vector.load %arg7[%c0_28, %c0_29] : memref<1x1xf32, #tpu.memory_space<vmem>>, vector<1x1xf32>
    %60 = vector.broadcast %59 : vector<1x1xf32> to vector<8x1xf32>
    %61 = arith.addf %58, %60 : vector<8x1xf32>
    %c0_30 = arith.constant 0 : index
    %c0_31 = arith.constant 0 : index
    %62 = vector.load %arg8[%c0_30, %c0_31] : memref<8x1xf32, #tpu.memory_space<vmem>>, vector<8x1xf32>
    tpu.vector_store %arg8[%c0_30, %c0_31], %61 {strides = array<i32>} : memref<8x1xf32, #tpu.memory_space<vmem>>, vector<8x1xf32>,
    return
  }
  func.func @transform_0(%arg0: i32) -> (i32, i32) {
    %c0_i32 = arith.constant 0 : i32
    %c0_i32_0 = arith.constant 0 : i32
    return %arg0, %c0_i32 : i32, i32
  }
  func.func @transform_1(%arg0: i32) -> (i32, i32) {
    %c0_i32 = arith.constant 0 : i32
    %c0_i32_0 = arith.constant 0 : i32
    %c0_i32_1 = arith.constant 0 : i32
    return %c0_i32, %c0_i32_0 : i32, i32
  }
  func.func @transform_2(%arg0: i32) -> (i32, i32) {
    %c0_i32 = arith.constant 0 : i32
    %c0_i32_0 = arith.constant 0 : i32
    %c0_i32_1 = arith.constant 0 : i32
    return %c0_i32, %c0_i32_0 : i32, i32
  }
  func.func @transform_3(%arg0: i32) -> (i32, i32) {
    %c0_i32 = arith.constant 0 : i32
    %c0_i32_0 = arith.constant 0 : i32
    %c0_i32_1 = arith.constant 0 : i32
    return %c0_i32, %c0_i32_0 : i32, i32
  }
  func.func @transform_4(%arg0: i32) -> (i32, i32) {
    %c0_i32 = arith.constant 0 : i32
    %c0_i32_0 = arith.constant 0 : i32
    %c0_i32_1 = arith.constant 0 : i32
    return %c0_i32, %c0_i32_0 : i32, i32
  }
  func.func @transform_5(%arg0: i32) -> (i32, i32) {
    %c0_i32 = arith.constant 0 : i32
    %c0_i32_0 = arith.constant 0 : i32
    %c0_i32_1 = arith.constant 0 : i32
    return %c0_i32, %c0_i32_0 : i32, i32
  }
  func.func @transform_6(%arg0: i32) -> (i32, i32) {
    %c0_i32 = arith.constant 0 : i32
    %c0_i32_0 = arith.constant 0 : i32
    %c0_i32_1 = arith.constant 0 : i32
    return %c0_i32, %c0_i32_0 : i32, i32
  }
  func.func @transform_7(%arg0: i32) -> (i32, i32) {
    %c0_i32 = arith.constant 0 : i32
    %c0_i32_0 = arith.constant 0 : i32
    return %arg0, %c0_i32 : i32, i32
  }
}

</mosaic_0001>

<llo_original>
// kernel: tpu_custom_call.1
$region0: #{tpu_custom_call.1}
  #allocation0 [shape = 'u32[]', space=smem, size = 0x4, offset = 0x4, fixed_abs, tag = 'smem constant byte address 0x4 - core index']
  #allocation1 [shape = 'u32[144,128]{1,0:T(1,128)}', space=vmem, size = 0x12000, scoped, tag = 'internal scratch']
  #allocation2 [shape = 'f32[1,1]{1,0:T(1,128)S(1)}', space=vmem, size = 0x200, scoped, tag = 'scoped memory for tpu_custom_call.1']
  %s0 = inlined_call_operand.hbm [shape: f32[8,32], index: 0, kind: input, shape index: {}]
  %s1 = inlined_call_operand.vmem [shape: bf16[32,64], index: 1, kind: input, shape index: {}]
  %s2 = inlined_call_operand.hbm [shape: f32[1,64], index: 2, kind: input, shape index: {}]
  %s3 = inlined_call_operand.vmem [shape: bf16[64,64], index: 3, kind: input, shape index: {}]
  %s4 = inlined_call_operand.vmem [shape: f32[1,64], index: 4, kind: input, shape index: {}]
  %s5 = inlined_call_operand.vmem [shape: bf16[64,2], index: 5, kind: input, shape index: {}]
  %s6 = inlined_call_operand.<no memory space> [shape: f32[1,1], index: 6, kind: input, shape index: {}]
  %s7 = inlined_call_operand.vmem [shape: f32[8,1], index: 7, kind: output, shape index: {}]
  %s8 = sld [smem:[#allocation0]]
  $region46: #{tpu_custom_call.1} parent=0
    _
  %s10 = ssub.s32 1, %s8
  %s11 = scalar_select 0, %s10, %s8
  %v12 = vstv %s6
  %13 = vst [vmem:[#allocation2] sm:$0x1] %v12
  $region1: #{tpu_custom_call.1} parent=0
    #allocation3 [shape = 'u8[4096]{0}', space=vmem, size = 0x1000, scoped, tag = 'input window, operand 0, single buffered']
    #allocation4 [shape = 's32[1]{0}', space=sflag, size = 0x4, scoped, tag = 'scoped memory for tpu_custom_call.1']
    #allocation5 [shape = 'u8[512]{0}', space=vmem, size = 0x400, scoped, tag = 'input window, operand 2, single buffered']
    #allocation6 [shape = 's32[1]{0}', space=sflag, size = 0x4, scoped, tag = 'scoped memory for tpu_custom_call.1']
    %14 = vsyncpa [#allocation4], 0
    %15 = vsyncpa [#allocation6], 0
    // Predicated region
    $region2: #{tpu_custom_call.1} parent=1 // pred_check
      _
    $region3: #{tpu_custom_call.1} parent=1 // pred_check_branch
      %17 = sbr.rel (0) target = $region5
    $region4: #{tpu_custom_call.1} parent=1 // pred_region
      %s19 = ssub.s32 128, 128
      %20 = vsyncadd [#allocation4], %s19
      %s22 = sshll.u32 [#allocation3], 4
      %s23 = int_to_ptr.vmem [resolvable:$true] %s22
      %25 = dma.hbm_to_vmem [thread:$0]  %s0, 128, %s23, [#allocation4]
    $region5: #{tpu_custom_call.1} parent=1 // pred_fallthru
      _
    // Predicated region
    $region6: #{tpu_custom_call.1} parent=1 // pred_check
      _
    $region7: #{tpu_custom_call.1} parent=1 // pred_check_branch
      %27 = sbr.rel (0) target = $region9
    $region8: #{tpu_custom_call.1} parent=1 // pred_region
      _
    $region9: #{tpu_custom_call.1} parent=1 // pred_fallthru
      _
    // Predicated region
    $region10: #{tpu_custom_call.1} parent=1 // pred_check
      _
    $region11: #{tpu_custom_call.1} parent=1 // pred_check_branch
      %29 = sbr.rel (0) target = $region13
    $region12: #{tpu_custom_call.1} parent=1 // pred_region
      %s31 = ssub.s32 16, 16
      %32 = vsyncadd [#allocation6], %s31
      %s34 = sshll.u32 [#allocation5], 4
      %s35 = int_to_ptr.vmem [resolvable:$true] %s34
      %37 = dma.hbm_to_vmem [thread:$0]  %s2, 16, %s35, [#allocation6]
    $region13: #{tpu_custom_call.1} parent=1 // pred_fallthru
      _
    // Predicated region
    $region14: #{tpu_custom_call.1} parent=1 // pred_check
      _
    $region15: #{tpu_custom_call.1} parent=1 // pred_check_branch
      %39 = sbr.rel (0) target = $region17
    $region16: #{tpu_custom_call.1} parent=1 // pred_region
      _
    $region17: #{tpu_custom_call.1} parent=1 // pred_fallthru
      _
    // Predicated region
    $region18: #{tpu_custom_call.1} parent=1 // pred_check
      _
    $region19: #{tpu_custom_call.1} parent=1 // pred_check_branch
      %41 = sbr.rel (0) target = $region21
    $region20: #{tpu_custom_call.1} parent=1 // pred_region
      _
    $region21: #{tpu_custom_call.1} parent=1 // pred_fallthru
      _
    // Predicated region
    $region22: #{tpu_custom_call.1} parent=1 // pred_check
      _
    $region23: #{tpu_custom_call.1} parent=1 // pred_check_branch
      %43 = sbr.rel (0) target = $region25
    $region24: #{tpu_custom_call.1} parent=1 // pred_region
      _
    $region25: #{tpu_custom_call.1} parent=1 // pred_fallthru
      _
    // Predicated region
    $region26: #{tpu_custom_call.1} parent=1 // pred_check
      _
    $region27: #{tpu_custom_call.1} parent=1 // pred_check_branch
      %45 = sbr.rel (0) target = $region29
    $region28: #{tpu_custom_call.1} parent=1 // pred_region
      _
    $region29: #{tpu_custom_call.1} parent=1 // pred_fallthru
      _
    // Predicated region
    $region30: #{tpu_custom_call.1} parent=1 // pred_check
      _
    $region31: #{tpu_custom_call.1} parent=1 // pred_check_branch
      %47 = sbr.rel (0) target = $region33
    $region32: #{tpu_custom_call.1} parent=1 // pred_region
      %48 = dma.done [#allocation4], 128
    $region33: #{tpu_custom_call.1} parent=1 // pred_fallthru
      _
    // Predicated region
    $region34: #{tpu_custom_call.1} parent=1 // pred_check
      _
    $region35: #{tpu_custom_call.1} parent=1 // pred_check_branch
      %50 = sbr.rel (0) target = $region37
    $region36: #{tpu_custom_call.1} parent=1 // pred_region
      %51 = dma.done [#allocation6], 16
    $region37: #{tpu_custom_call.1} parent=1 // pred_fallthru
      _
    %v54 = vld [vmem:[#allocation3] sm:$0xff]
    %v55 = vpack.c.bf16 %v54, %v54
    %v56 = vld [vmem:[%s1] sm:$0xf]
    %v57 = vld [vmem:[%s1 + $0x4] sm:$0xf]
    %v58 = vld [vmem:[%s1 + $0x8] sm:$0xf]
    %v59 = vld [vmem:[%s1 + $0xc] sm:$0xf]
    %v60 = vld [vmem:[#allocation5] sm:$0x1]
    %v62 = vlaneseq
    %v63 = vshrl.u32 %v62, 7
    %v64 = vsub.s32 0, %v63
    %v65 = vrot.slane %v60, %v64
    %v71 = vunpack.c.l.b16 %v56
    %v72 = vunpack.c.l.b16 %v57
    %v73 = vunpack.c.l.b16 %v58
    %v74 = vunpack.c.l.b16 %v59
    %v75 = vpack.c.b16 %v72, %v71
    %v76 = vpack.c.b16 %v74, %v73
    %vm79 = vcmask 261120
    %v81 = vsel %vm79, %v55, 0
    %83 = vmatprep.subr.bf16.mxu0 0
    %84 = vmatpush1.bf16.msra.mxu0 %v75
    %85 = vmatprep.subr.bf16.mxu0 0
    %86 = vmatpush1.bf16.msra.mxu0 %v76
    %87 = vmatprep.subr.bf16.mxu0 0
    %88 = vmatpush1.bf16.msra.mxu0 0
    %89 = vmatprep.subr.bf16.mxu0 0
    %90 = vmatpush1.bf16.msra.mxu0 0
    %91 = vmatprep.subr.bf16.mxu0 0
    %92 = vmatpush1.bf16.msra.mxu0 0
    %93 = vmatprep.subr.bf16.mxu0 0
    %94 = vmatpush1.bf16.msra.mxu0 0
    %95 = vmatprep.subr.bf16.mxu0 0
    %96 = vmatpush1.bf16.msra.mxu0 0
    %97 = vmatprep.subr.bf16.mxu0 0
    %98 = vmatpush1.bf16.msra.mxu0 0
    %99 = vmatprep.subr.bf16.mxu0 0
    %100 = vmatpush1.bf16.msra.mxu0 0
    %101 = vmatprep.subr.bf16.mxu0 0
    %102 = vmatpush1.bf16.msra.mxu0 0
    %103 = vmatprep.subr.bf16.mxu0 0
    %104 = vmatpush1.bf16.msra.mxu0 0
    %105 = vmatprep.subr.bf16.mxu0 0
    %106 = vmatpush1.bf16.msra.mxu0 0
    %107 = vmatprep.subr.bf16.mxu0 0
    %108 = vmatpush1.bf16.msra.mxu0 0
    %109 = vmatprep.subr.bf16.mxu0 0
    %110 = vmatpush1.bf16.msra.mxu0 0
    %111 = vmatprep.subr.bf16.mxu0 0
    %112 = vmatpush1.bf16.msra.mxu0 0
    %113 = vmatprep.subr.bf16.mxu0 0
    %114 = vmatpush1.bf16.msra.mxu0 0
    %115 = vmatprep.mubr.bf16.mxu0 0
    %116 = vmatmul.mubr.bf16.gmra.mrb[0].mxu0 %v81
    %v117 = vpop.f32.mrb[0].mxu0
    %v118 = vadd.f32 %v65, %v117
    %v119 = vpop.f32.mrb[0].mxu0
    %v120 = vpop.f32.mrb[0].mxu0
    %v121 = vpop.f32.mrb[0].mxu0
    %122 = vdwg.mxu0
    %v123 = vmax.f32 %v118, 0.0
    %v124 = vpack.c.bf16 %v123, %v123
    %vm125 = vcmask 523264
    %v127 = vsel %vm125, %v124, 0
    %129 = vmatprep.subr.bf16.mxu0 0
    %130 = vmatpush1.bf16.msra.mxu0 1065369472
    %131 = vmatprep.subr.bf16.mxu0 0
    %132 = vmatpush1.bf16.msra.mxu0 1065369472
    %133 = vmatprep.subr.bf16.mxu0 0
    %134 = vmatpush1.bf16.msra.mxu0 1065369472
    %135 = vmatprep.subr.bf16.mxu0 0
    %136 = vmatpush1.bf16.msra.mxu0 1065369472
    %137 = vmatprep.subr.bf16.mxu0 0
    %138 = vmatpush1.bf16.msra.mxu0 0
    %139 = vmatprep.subr.bf16.mxu0 0
    %140 = vmatpush1.bf16.msra.mxu0 0
    %141 = vmatprep.subr.bf16.mxu0 0
    %142 = vmatpush1.bf16.msra.mxu0 0
    %143 = vmatprep.subr.bf16.mxu0 0
    %144 = vmatpush1.bf16.msra.mxu0 0
    %145 = vmatprep.subr.bf16.mxu0 0
    %146 = vmatpush1.bf16.msra.mxu0 0
    %147 = vmatprep.subr.bf16.mxu0 0
    %148 = vmatpush1.bf16.msra.mxu0 0
    %149 = vmatprep.subr.bf16.mxu0 0
    %150 = vmatpush1.bf16.msra.mxu0 0
    %151 = vmatprep.subr.bf16.mxu0 0
    %152 = vmatpush1.bf16.msra.mxu0 0
    %153 = vmatprep.subr.bf16.mxu0 0
    %154 = vmatpush1.bf16.msra.mxu0 0
    %155 = vmatprep.subr.bf16.mxu0 0
    %156 = vmatpush1.bf16.msra.mxu0 0
    %157 = vmatprep.subr.bf16.mxu0 0
    %158 = vmatpush1.bf16.msra.mxu0 0
    %159 = vmatprep.subr.bf16.mxu0 0
    %160 = vmatpush1.bf16.msra.mxu0 0
    %161 = vmatprep.mubr.bf16.mxu0 0
    %162 = vmatmul.mubr.bf16.gmra.mrb[0].mxu0 %v127
    %v163 = vpop.f32.mrb[0].mxu0
    %v164 = vadd.f32 0.0, %v163
    %v165 = vpop.f32.mrb[0].mxu0
    %v166 = vpop.f32.mrb[0].mxu0
    %v167 = vpop.f32.mrb[0].mxu0
    %168 = vdwg.mxu0
    %v169 = vmul.f32 %v123, %v123
    %v170 = vpack.c.bf16 %v169, %v169
    %v172 = vsel %vm125, %v170, 0
    %174 = vmatprep.subr.bf16.mxu0 0
    %175 = vmatpush1.bf16.msra.mxu0 1065369472
    %176 = vmatprep.subr.bf16.mxu0 0
    %177 = vmatpush1.bf16.msra.mxu0 1065369472
    %178 = vmatprep.subr.bf16.mxu0 0
    %179 = vmatpush1.bf16.msra.mxu0 1065369472
    %180 = vmatprep.subr.bf16.mxu0 0
    %181 = vmatpush1.bf16.msra.mxu0 1065369472
    %182 = vmatprep.subr.bf16.mxu0 0
    %183 = vmatpush1.bf16.msra.mxu0 0
    %184 = vmatprep.subr.bf16.mxu0 0
    %185 = vmatpush1.bf16.msra.mxu0 0
    %186 = vmatprep.subr.bf16.mxu0 0
    %187 = vmatpush1.bf16.msra.mxu0 0
    %188 = vmatprep.subr.bf16.mxu0 0
    %189 = vmatpush1.bf16.msra.mxu0 0
    %190 = vmatprep.subr.bf16.mxu0 0
    %191 = vmatpush1.bf16.msra.mxu0 0
    %192 = vmatprep.subr.bf16.mxu0 0
    %193 = vmatpush1.bf16.msra.mxu0 0
    %194 = vmatprep.subr.bf16.mxu0 0
    %195 = vmatpush1.bf16.msra.mxu0 0
    %196 = vmatprep.subr.bf16.mxu0 0
    %197 = vmatpush1.bf16.msra.mxu0 0
    %198 = vmatprep.subr.bf16.mxu0 0
    %199 = vmatpush1.bf16.msra.mxu0 0
    %200 = vmatprep.subr.bf16.mxu0 0
    %201 = vmatpush1.bf16.msra.mxu0 0
    %202 = vmatprep.subr.bf16.mxu0 0
    %203 = vmatpush1.bf16.msra.mxu0 0
    %204 = vmatprep.subr.bf16.mxu0 0
    %205 = vmatpush1.bf16.msra.mxu0 0
    %206 = vmatprep.mubr.bf16.mxu0 0
    %207 = vmatmul.mubr.bf16.gmra.mrb[0].mxu0 %v172
    %v208 = vpop.f32.mrb[0].mxu0
    %v209 = vadd.f32 0.0, %v208
    %v210 = vpop.f32.mrb[0].mxu0
    %v211 = vpop.f32.mrb[0].mxu0
    %v212 = vpop.f32.mrb[0].mxu0
    %213 = vdwg.mxu0
    %v214 = vmul.f32 %v164, 0.015625
    %v215 = vmul.f32 %v209, 0.015625
    %v216 = vmul.f32 %v214, %v214
    %v217 = vsub.f32 %v215, %v216
    %v218 = vmax.f32 %v217, 0.0
    %220 = vset.pattern.permute.xlu0 0
    %221 = vperm.xlu0 %220, %v214
    %v222 = vpop.permute.xlu0 %221
    %v224 = vsub.f32 %v123, %v222
    %v225 = vadd.f32 %v218, 1e-05
    %v226 = vrsqrt.pop %v225
    %228 = vset.pattern.permute.xlu0 0
    %229 = vperm.xlu0 %228, %v226
    %v230 = vpop.permute.xlu0 %229
    %v232 = vmul.f32 %v224, %v230
    %v233 = vpack.c.bf16 %v232, %v232
    %v234 = vld [vmem:[%s3] sm:$0xf]
    %v235 = vld [vmem:[%s3 + $0x4] sm:$0xf]
    %v236 = vld [vmem:[%s3 + $0x8] sm:$0xf]
    %v237 = vld [vmem:[%s3 + $0xc] sm:$0xf]
    %v238 = vld [vmem:[%s3 + $0x10] sm:$0xf]
    %v239 = vld [vmem:[%s3 + $0x14] sm:$0xf]
    %v240 = vld [vmem:[%s3 + $0x18] sm:$0xf]
    %v241 = vld [vmem:[%s3 + $0x1c] sm:$0xf]
    %v242 = vld [vmem:[%s4] sm:$0x1]
    %v244 = vlaneseq
    %v245 = vshrl.u32 %v244, 7
    %v246 = vsub.s32 0, %v245
    %v247 = vrot.slane %v242, %v246
    %v257 = vunpack.c.l.b16 %v234
    %v258 = vunpack.c.l.b16 %v235
    %v259 = vunpack.c.l.b16 %v236
    %v260 = vunpack.c.l.b16 %v237
    %v261 = vunpack.c.l.b16 %v238
    %v262 = vunpack.c.l.b16 %v239
    %v263 = vunpack.c.l.b16 %v240
    %v264 = vunpack.c.l.b16 %v241
    %v265 = vpack.c.b16 %v258, %v257
    %v266 = vpack.c.b16 %v260, %v259
    %v267 = vpack.c.b16 %v262, %v261
    %v268 = vpack.c.b16 %v264, %v263
    %v274 = vsel %vm125, %v233, 0
    %276 = vmatprep.subr.bf16.mxu0 0
    %277 = vmatpush1.bf16.msra.mxu0 %v265
    %278 = vmatprep.subr.bf16.mxu0 0
    %279 = vmatpush1.bf16.msra.mxu0 %v266
    %280 = vmatprep.subr.bf16.mxu0 0
    %281 = vmatpush1.bf16.msra.mxu0 %v267
    %282 = vmatprep.subr.bf16.mxu0 0
    %283 = vmatpush1.bf16.msra.mxu0 %v268
    %284 = vmatprep.subr.bf16.mxu0 0
    %285 = vmatpush1.bf16.msra.mxu0 0
    %286 = vmatprep.subr.bf16.mxu0 0
    %287 = vmatpush1.bf16.msra.mxu0 0
    %288 = vmatprep.subr.bf16.mxu0 0
    %289 = vmatpush1.bf16.msra.mxu0 0
    %290 = vmatprep.subr.bf16.mxu0 0
    %291 = vmatpush1.bf16.msra.mxu0 0
    %292 = vmatprep.subr.bf16.mxu0 0
    %293 = vmatpush1.bf16.msra.mxu0 0
    %294 = vmatprep.subr.bf16.mxu0 0
    %295 = vmatpush1.bf16.msra.mxu0 0
    %296 = vmatprep.subr.bf16.mxu0 0
    %297 = vmatpush1.bf16.msra.mxu0 0
    %298 = vmatprep.subr.bf16.mxu0 0
    %299 = vmatpush1.bf16.msra.mxu0 0
    %300 = vmatprep.subr.bf16.mxu0 0
    %301 = vmatpush1.bf16.msra.mxu0 0
    %302 = vmatprep.subr.bf16.mxu0 0
    %303 = vmatpush1.bf16.msra.mxu0 0
    %304 = vmatprep.subr.bf16.mxu0 0
    %305 = vmatpush1.bf16.msra.mxu0 0
    %306 = vmatprep.subr.bf16.mxu0 0
    %307 = vmatpush1.bf16.msra.mxu0 0
    %308 = vmatprep.mubr.bf16.mxu0 0
    %309 = vmatmul.mubr.bf16.gmra.mrb[0].mxu0 %v274
    %v310 = vpop.f32.mrb[0].mxu0
    %v311 = vadd.f32 %v247, %v310
    %v312 = vpop.f32.mrb[0].mxu0
    %v313 = vpop.f32.mrb[0].mxu0
    %v314 = vpop.f32.mrb[0].mxu0
    %315 = vdwg.mxu0
    %v316 = vmax.f32 %v311, 0.0
    %v317 = vpack.c.bf16 %v316, %v316
    %v318 = vld [vmem:[%s5] sm:$0xf]
    %v319 = vld [vmem:[%s5 + $0x4] sm:$0xf]
    %v320 = vld [vmem:[%s5 + $0x8] sm:$0xf]
    %v321 = vld [vmem:[%s5 + $0xc] sm:$0xf]
    %v322 = vld [vmem:[%s5 + $0x10] sm:$0xf]
    %v323 = vld [vmem:[%s5 + $0x14] sm:$0xf]
    %v324 = vld [vmem:[%s5 + $0x18] sm:$0xf]
    %v325 = vld [vmem:[%s5 + $0x1c] sm:$0xf]
    %v334 = vunpack.c.l.b16 %v318
    %v335 = vunpack.c.l.b16 %v319
    %v336 = vunpack.c.l.b16 %v320
    %v337 = vunpack.c.l.b16 %v321
    %v338 = vunpack.c.l.b16 %v322
    %v339 = vunpack.c.l.b16 %v323
    %v340 = vunpack.c.l.b16 %v324
    %v341 = vunpack.c.l.b16 %v325
    %v342 = vpack.c.b16 %v335, %v334
    %v343 = vpack.c.b16 %v337, %v336
    %v344 = vpack.c.b16 %v339, %v338
    %v345 = vpack.c.b16 %v341, %v340
    %v351 = vsel %vm125, %v317, 0
    %353 = vmatprep.subr.bf16.mxu0 0
    %354 = vmatpush1.bf16.msra.mxu0 %v342
    %355 = vmatprep.subr.bf16.mxu0 0
    %356 = vmatpush1.bf16.msra.mxu0 %v343
    %357 = vmatprep.subr.bf16.mxu0 0
    %358 = vmatpush1.bf16.msra.mxu0 %v344
    %359 = vmatprep.subr.bf16.mxu0 0
    %360 = vmatpush1.bf16.msra.mxu0 %v345
    %361 = vmatprep.subr.bf16.mxu0 0
    %362 = vmatpush1.bf16.msra.mxu0 0
    %363 = vmatprep.subr.bf16.mxu0 0
    %364 = vmatpush1.bf16.msra.mxu0 0
    %365 = vmatprep.subr.bf16.mxu0 0
    %366 = vmatpush1.bf16.msra.mxu0 0
    %367 = vmatprep.subr.bf16.mxu0 0
    %368 = vmatpush1.bf16.msra.mxu0 0
    %369 = vmatprep.subr.bf16.mxu0 0
    %370 = vmatpush1.bf16.msra.mxu0 0
    %371 = vmatprep.subr.bf16.mxu0 0
    %372 = vmatpush1.bf16.msra.mxu0 0
    %373 = vmatprep.subr.bf16.mxu0 0
    %374 = vmatpush1.bf16.msra.mxu0 0
    %375 = vmatprep.subr.bf16.mxu0 0
    %376 = vmatpush1.bf16.msra.mxu0 0
    %377 = vmatprep.subr.bf16.mxu0 0
    %378 = vmatpush1.bf16.msra.mxu0 0
    %379 = vmatprep.subr.bf16.mxu0 0
    %380 = vmatpush1.bf16.msra.mxu0 0
    %381 = vmatprep.subr.bf16.mxu0 0
    %382 = vmatpush1.bf16.msra.mxu0 0
    %383 = vmatprep.subr.bf16.mxu0 0
    %384 = vmatpush1.bf16.msra.mxu0 0
    %385 = vmatprep.mubr.bf16.mxu0 0
    %386 = vmatmul.mubr.bf16.gmra.mrb[0].mxu0 %v351
    %v387 = vpop.f32.mrb[0].mxu0
    %v388 = vadd.f32 0.0, %v387
    %v389 = vpop.f32.mrb[0].mxu0
    %v390 = vpop.f32.mrb[0].mxu0
    %v391 = vpop.f32.mrb[0].mxu0
    %392 = vdwg.mxu0
    %v393 = vmul.f32 %v316, %v316
    %v394 = vpack.c.bf16 %v393, %v393
    %v396 = vsel %vm125, %v394, 0
    %398 = vmatprep.subr.bf16.mxu0 0
    %399 = vmatpush1.bf16.msra.mxu0 1065369472
    %400 = vmatprep.subr.bf16.mxu0 0
    %401 = vmatpush1.bf16.msra.mxu0 1065369472
    %402 = vmatprep.subr.bf16.mxu0 0
    %403 = vmatpush1.bf16.msra.mxu0 1065369472
    %404 = vmatprep.subr.bf16.mxu0 0
    %405 = vmatpush1.bf16.msra.mxu0 1065369472
    %406 = vmatprep.subr.bf16.mxu0 0
    %407 = vmatpush1.bf16.msra.mxu0 0
    %408 = vmatprep.subr.bf16.mxu0 0
    %409 = vmatpush1.bf16.msra.mxu0 0
    %410 = vmatprep.subr.bf16.mxu0 0
    %411 = vmatpush1.bf16.msra.mxu0 0
    %412 = vmatprep.subr.bf16.mxu0 0
    %413 = vmatpush1.bf16.msra.mxu0 0
    %414 = vmatprep.subr.bf16.mxu0 0
    %415 = vmatpush1.bf16.msra.mxu0 0
    %416 = vmatprep.subr.bf16.mxu0 0
    %417 = vmatpush1.bf16.msra.mxu0 0
    %418 = vmatprep.subr.bf16.mxu0 0
    %419 = vmatpush1.bf16.msra.mxu0 0
    %420 = vmatprep.subr.bf16.mxu0 0
    %421 = vmatpush1.bf16.msra.mxu0 0
    %422 = vmatprep.subr.bf16.mxu0 0
    %423 = vmatpush1.bf16.msra.mxu0 0
    %424 = vmatprep.subr.bf16.mxu0 0
    %425 = vmatpush1.bf16.msra.mxu0 0
    %426 = vmatprep.subr.bf16.mxu0 0
    %427 = vmatpush1.bf16.msra.mxu0 0
    %428 = vmatprep.subr.bf16.mxu0 0
    %429 = vmatpush1.bf16.msra.mxu0 0
    %430 = vmatprep.mubr.bf16.mxu0 0
    %431 = vmatmul.mubr.bf16.gmra.mrb[0].mxu0 %v396
    %v432 = vpop.f32.mrb[0].mxu0
    %v433 = vadd.f32 0.0, %v432
    %v434 = vpop.f32.mrb[0].mxu0
    %v435 = vpop.f32.mrb[0].mxu0
    %v436 = vpop.f32.mrb[0].mxu0
    %437 = vdwg.mxu0
    %v438 = vmul.f32 %v388, 0.015625
    %v439 = vmul.f32 %v433, 0.015625
    %v440 = vmul.f32 %v438, %v438
    %v441 = vsub.f32 %v439, %v440
    %v442 = vmax.f32 %v441, 0.0
    %v443 = vadd.f32 %v442, 1e-05
    %v444 = vrsqrt.pop %v443
    %446 = vrot.lane.b32.xlu0 %v444, 1
    %v447 = vpop.permute.xlu0 %446
    %v449 = vmul.f32 %v388, %v447
    %v450 = vld [vmem:[#allocation2] sm:$0x1]
    %v452 = vlaneseq
    %v453 = vshrl.u32 %v452, 7
    %v454 = vsub.s32 0, %v453
    %v455 = vrot.slane %v450, %v454
    %456 = vrot.lane.b32.xlu0 %v455, 1
    %v457 = vpop.permute.xlu0 %456
    %v459 = vadd.f32 %v449, %v457
    %461 = vrot.lane.b32.xlu0 %v459, 127
    %v462 = vpop.permute.xlu0 %461
    %vm464 = vcmask 7168
    %465 = vst.msk [vmem:[%s7] sm:$0xff] %vm464, %v462
    // Predicated region
    $region38: #{tpu_custom_call.1} parent=1 // pred_check
      _
    $region39: #{tpu_custom_call.1} parent=1 // pred_check_branch
      %467 = sbr.rel (0) target = $region41
    $region40: #{tpu_custom_call.1} parent=1 // pred_region
      _
    $region41: #{tpu_custom_call.1} parent=1 // pred_fallthru
      _
    // Predicated region
    $region42: #{tpu_custom_call.1} parent=1 // pred_check
      _
    $region43: #{tpu_custom_call.1} parent=1 // pred_check_branch
      %469 = sbr.rel (0) target = $region45
    $region44: #{tpu_custom_call.1} parent=1 // pred_region
      _
    $region45: #{tpu_custom_call.1} parent=1 // pred_fallthru
      _
    %470 = vsyncpa [#allocation4], 1
    %471 = vsyncpa [#allocation6], 1

</llo_original>
